<compile_context>
chip_gen: v5e
topology: v5e:2x2
jax: 0.10.0
libtpu: 0.0.40
codegen_flags: <defaults>
</compile_context>

<pallas_src>
import functools

import jax
import jax.numpy as jnp
from jax import lax
from jax.experimental import pallas as pl
from jax.experimental.pallas import tpu as pltpu

K_SIZE = 4
STRIDE = 2
PADDING = 1


def _round_up(x, m):
    return ((x + m - 1) // m) * m


def _weight_to_subpixel_mat(w):
    """ConvTranspose2d weight (Cin, Cout, 4, 4) -> (Cin*9, Cout*4).

    Row order is (c, a, b); column order is (oc, py, px): the entry multiplying
    input tap (i-1+a, j-1+b) to produce output pixel (2i+py, 2j+px).  That tap
    corresponds to deconv tap ky = py + 3 - 2a, kx = px + 3 - 2b (zero when the
    tap falls outside the 4x4 kernel)."""
    cin, cout = w.shape[0], w.shape[1]
    w3 = jnp.zeros((cin, 3, 3, cout, 2, 2), w.dtype)
    for a in range(3):
        for b in range(3):
            for py in range(2):
                for px in range(2):
                    ky = py + 3 - 2 * a
                    kx = px + 3 - 2 * b
                    if 0 <= ky < K_SIZE and 0 <= kx < K_SIZE:
                        w3 = w3.at[:, a, b, :, py, px].set(w[:, :, ky, kx])
    return w3.reshape(cin * 9, cout * 4)


def _up4_kernel(x_a_ref, x_b_ref, w_ref, b_ref, o_ref, *, h, w, pad_l):
    """One output tile: build the 9 boundary-masked taps from the two adjacent
    input lane blocks (static slices of their concatenation), one MXU matmul
    against the packed complex sub-pixel weights, bias add + complex_relu."""
    i = pl.program_id(0)
    tile_m = o_ref.shape[1]

    # Halo window covering flattened pixels [i*tile_m - pad_l, i*tile_m - pad_l + 2*tile_m).
    win = jnp.concatenate([x_a_ref[...], x_b_ref[...]], axis=1)   # (2*Cin, 2*tile_m)

    # Per-lane (row, col) of the base pixel.  Exact f32 arithmetic (indices stay far
    # below 2^24) avoids relying on vector integer div lowering.
    pf = (lax.broadcasted_iota(jnp.int32, (1, tile_m), 1) + i * tile_m
          ).astype(jnp.float32)
    grow = jnp.floor(pf / float(w))                      # global row index n*H + r
    colf = pf - grow * float(w)                          # column j within the row
    rowf = grow - jnp.floor(grow / float(h)) * float(h)  # row r within the image

    row_ok = {-1: rowf >= 1.0, 0: None, 1: rowf <= float(h - 2)}
    col_ok = {-1: colf >= 1.0, 0: None, 1: colf <= float(w - 2)}

    taps = []
    for da in (-1, 0, 1):
        for db in (-1, 0, 1):
            u0 = pad_l + da * w + db                     # static slice start
            tap = win[:, u0:u0 + tile_m]                 # (2*Cin, tile_m)
            rm, cm = row_ok[da], col_ok[db]
            if rm is None:
                mask = cm
            elif cm is None:
                mask = rm
            else:
                mask = jnp.logical_and(rm, cm)
            if mask is not None:
                tap = jnp.where(mask, tap, 0.0)
            taps.append(tap)
    patches = jnp.concatenate(taps, axis=0)              # (9*2*Cin, tile_m)

    acc = jnp.dot(w_ref[...], patches, preferred_element_type=jnp.float32)
    # complex_relu = relu on both the real and the imag row groups.
    o_ref[...] = jnp.maximum(acc + b_ref[...], 0.0)


def _pick_tile_m(m, w):
    # The two-block window must cover the +/-(W+1) halo -> tile_m >= 2*(W+1).
    min_tile = max(128, _round_up(2 * (w + 1), 128))
    # Pipelining: aim for >= 8 grid steps (>= 4 per TensorCore with megacore),
    # capped at ~1024 lanes (measured HBM-roofline sweet spot), never below min_tile.
    want = _round_up(max(1, -(-m // 8)), 128)
    cap = max(min_tile, 1024)
    return int(min(max(want, min_tile), cap))


def _vmem_limit_bytes(cin2, r_out, tile_m, kw):
    in_b = 2 * 2 * cin2 * tile_m * 4                      # two halo views, double-buffered
    out_b = 2 * r_out * tile_m * 4                        # output tile, double-buffered
    w_b = 2 * r_out * max(kw, 128) * 4 + 2 * r_out * 128 * 4
    tmp_b = (9 + 3) * cin2 * tile_m * 4 + 2 * r_out * tile_m * 4   # in-kernel temporaries
    need = in_b + out_b + w_b + tmp_b + (2 << 20)
    return int(min(max(need, 16 << 20), 64 << 20))


@functools.partial(jax.jit, static_argnames=("tile_m",))
def _up4_forward_impl(x_real, x_imag, wr, wi, br, bi, *, tile_m):
    n, cin, h, w = x_real.shape
    cout = wr.shape[1]
    m = n * h * w
    cin2 = 2 * cin
    r_out = 2 * cout * 4                                  # rows: (re/im, oc, py, px)
    kw = 9 * cin2                                         # contraction: (tap, re/im-in, c)
    num_tiles = -(-m // tile_m)
    m_pad = num_tiles * tile_m
    pad_l = w + 1                                         # left halo pre-pad
    l_total = (num_tiles + 1) * tile_m                    # block i+1 must exist for i = last

    # --- input: (2*Cin, L) with pixels raster-flattened on the lane axis ------------
    xf = jnp.concatenate([x_real, x_imag], axis=1)        # (N, 2Cin, H, W)
    xf = jnp.transpose(xf, (1, 0, 2, 3)).reshape(cin2, m)
    xf = jnp.pad(xf, ((0, 0), (pad_l, l_total - pad_l - m)))

    # --- packed complex sub-pixel weights: (r_out, 9*2*Cin) --------------------------
    # real = convT(xr; wr) - convT(xi; wi);  imag = convT(xr; wi) + convT(xi; wr)
    w3r = _weight_to_subpixel_mat(wr).reshape(cin, 9, cout * 4)   # [c, tap, (oc,py,px)]
    w3i = _weight_to_subpixel_mat(wi).reshape(cin, 9, cout * 4)
    w_from_xr = jnp.concatenate([w3r, w3i], axis=-1)      # (cin, 9, r_out)
    w_from_xi = jnp.concatenate([-w3i, w3r], axis=-1)     # (cin, 9, r_out)
    wt = jnp.concatenate([w_from_xr, w_from_xi], axis=0)  # (2cin, 9, r_out)
    wt = jnp.transpose(wt, (2, 1, 0)).reshape(r_out, kw)  # col = tap*2cin + (reim_in, c)

    # Bias (matches the two-real-ConvTranspose2d complex formulation): real rows get
    # (br - bi), imag rows get (br + bi); added in-kernel on the VPU before the ReLU.
    bias = jnp.concatenate([jnp.repeat(br - bi, 4),
                            jnp.repeat(br + bi, 4)])[:, None]     # (r_out, 1)

    kernel = functools.partial(_up4_kernel, h=h, w=w, pad_l=pad_l)
    out = pl.pallas_call(
        kernel,
        out_shape=jax.ShapeDtypeStruct((r_out, m_pad), jnp.float32),
        grid_spec=pltpu.PrefetchScalarGridSpec(
            num_scalar_prefetch=0,
            grid=(num_tiles,),
            in_specs=[
                pl.BlockSpec((cin2, tile_m), lambda i: (0, i)),      # centre block
                pl.BlockSpec((cin2, tile_m), lambda i: (0, i + 1)),  # right block (halo)
                pl.BlockSpec((r_out, kw), lambda i: (0, 0)),         # packed weights
                pl.BlockSpec((r_out, 1), lambda i: (0, 0)),          # packed bias
            ],
            out_specs=pl.BlockSpec((r_out, tile_m), lambda i: (0, i)),
        ),
        compiler_params=pltpu.CompilerParams(
            dimension_semantics=("parallel",),
            vmem_limit_bytes=_vmem_limit_bytes(cin2, r_out, tile_m, kw)),
    )(xf, xf, wt, bias)

    # Unscramble (re/im, oc, py, px) x (n, i, j) -> NCHW planes (kept in XLA, see TODO).
    out = out[:, :m].reshape(2, cout, 2, 2, n, h, w)
    out = jnp.transpose(out, (0, 4, 1, 5, 2, 6, 3))       # (reim, n, oc, i, py, j, px)
    out = out.reshape(2, n, cout, 2 * h, 2 * w)
    return out[0], out[1]


def up4_forward(x_real, x_imag, wr, wi, br, bi):
    n, cin, h, w = x_real.shape
    tile_m = _pick_tile_m(n * h * w, w)
    return _up4_forward_impl(x_real, x_imag, wr, wi, br, bi, tile_m=tile_m)


def _convT_ref(x, w, b):
    """Pure-JAX reference ConvTranspose2d(k=4,s=2,p=1) via lhs-dilated conv."""
    wf = w[:, :, ::-1, ::-1]  # flip spatial dims; 'IOHW' handles channel layout
    pad = K_SIZE - 1 - PADDING
    y = lax.conv_general_dilated(
        x, wf, window_strides=(1, 1), padding=((pad, pad), (pad, pad)),
        lhs_dilation=(STRIDE, STRIDE),
        dimension_numbers=("NCHW", "IOHW", "NCHW"))
    return y + b.reshape(1, -1, 1, 1)


if __name__ == "__main__":
    in_channels, out_channels = 4, 4
    N, H, W = 2, 16, 16

    key = jax.random.PRNGKey(0)
    kxr, kxi, kwr, kwi, kbr, kbi = jax.random.split(key, 6)

    x_real = jax.random.normal(kxr, (N, in_channels, H, W), jnp.float32)
    x_imag = jax.random.normal(kxi, (N, in_channels, H, W), jnp.float32)

    # PyTorch-style uniform init for ConvTranspose2d weights/biases (deterministic).
    fan = in_channels * K_SIZE * K_SIZE
    bound = 1.0 / (fan ** 0.5)
    wr = jax.random.uniform(kwr, (in_channels, out_channels, K_SIZE, K_SIZE),
                            jnp.float32, -bound, bound)
    wi = jax.random.uniform(kwi, (in_channels, out_channels, K_SIZE, K_SIZE),
                            jnp.float32, -bound, bound)
    br = jax.random.uniform(kbr, (out_channels,), jnp.float32, -bound, bound)
    bi = jax.random.uniform(kbi, (out_channels,), jnp.float32, -bound, bound)

    out_r, out_i = up4_forward(x_real, x_imag, wr, wi, br, bi)
    jax.block_until_ready((out_r, out_i))

    # Sanity check against a pure-JAX complex ConvTranspose2d + complex_relu.
    ref_r = jnp.maximum(_convT_ref(x_real, wr, br) - _convT_ref(x_imag, wi, bi), 0.0)
    ref_i = jnp.maximum(_convT_ref(x_imag, wr, br) + _convT_ref(x_real, wi, bi), 0.0)
    assert out_r.shape == (N, out_channels, 2 * H, 2 * W)
    assert out_i.shape == (N, out_channels, 2 * H, 2 * W)
    assert jnp.allclose(out_r, ref_r, atol=1e-4, rtol=1e-4)
    assert jnp.allclose(out_i, ref_i, atol=1e-4, rtol=1e-4)

    print("KERNEL_OK")
</pallas_src>

<mosaic_0001>
module attributes {stable_mosaic.version = 11 : i64} {
  func.func @_up4_kernel(%arg0: i32, %arg1: memref<8x128xf32, #tpu.memory_space<vmem>>, %arg2: memref<8x128xf32, #tpu.memory_space<vmem>>, %arg3: memref<32x72xf32, #tpu.memory_space<vmem>>, %arg4: memref<32x1xf32, #tpu.memory_space<vmem>>, %arg5: memref<32x128xf32, #tpu.memory_space<vmem>>) attributes {dimension_semantics = [#tpu.dimension_semantics<parallel>], iteration_bounds = array<i64: 4>, scalar_prefetch = 0 : i64, scratch_operands = 0 : i64, tpu.core_type = #tpu.core_type<tc>, window_params = [{transform_indices = @transform_0, window_bounds = array<i64: 8, 128>}, {transform_indices = @transform_1, window_bounds = array<i64: 8, 128>}, {pipeline_mode = #tpu.pipeline_mode<synchronous>, transform_indices = @transform_2, window_bounds = array<i64: 32, 72>}, {pipeline_mode = #tpu.pipeline_mode<synchronous>, transform_indices = @transform_3, window_bounds = array<i64: 32, 1>}, {transform_indices = @transform_4, window_bounds = array<i64: 32, 128>}]} {
    %c0 = arith.constant 0 : index
    %c0_0 = arith.constant 0 : index
    %0 = vector.load %arg1[%c0, %c0_0] : memref<8x128xf32, #tpu.memory_space<vmem>>, vector<8x128xf32>
    %c0_1 = arith.constant 0 : index
    %c0_2 = arith.constant 0 : index
    %1 = vector.load %arg2[%c0_1, %c0_2] : memref<8x128xf32, #tpu.memory_space<vmem>>, vector<8x128xf32>
    %2 = tpu.concatenate %0, %1 in 1 : vector<8x128xf32>, vector<8x128xf32> -> vector<8x256xf32>
    %3 = tpu.iota {dimensions = array<i32: 1>} : vector<1x128xi32>
    %c128_i32 = arith.constant 128 : i32
    %4 = arith.muli %arg0, %c128_i32 : i32
    %5 = vector.broadcast %4 : i32 to vector<1x128xi32>
    %6 = arith.addi %3, %5 : vector<1x128xi32>
    %7 = arith.sitofp %6 : vector<1x128xi32> to vector<1x128xf32>
    %cst = arith.constant 1.600000e+01 : f32
    %8 = vector.broadcast %cst : f32 to vector<1x128xf32>
    %9 = arith.divf %7, %8 : vector<1x128xf32>
    %10 = math.floor %9 : vector<1x128xf32>
    %cst_3 = arith.constant 1.600000e+01 : f32
    %11 = vector.broadcast %cst_3 : f32 to vector<1x128xf32>
    %12 = arith.mulf %10, %11 : vector<1x128xf32>
    %13 = arith.subf %7, %12 : vector<1x128xf32>
    %cst_4 = arith.constant 1.600000e+01 : f32
    %14 = vector.broadcast %cst_4 : f32 to vector<1x128xf32>
    %15 = arith.divf %10, %14 : vector<1x128xf32>
    %16 = math.floor %15 : vector<1x128xf32>
    %cst_5 = arith.constant 1.600000e+01 : f32
    %17 = vector.broadcast %cst_5 : f32 to vector<1x128xf32>
    %18 = arith.mulf %16, %17 : vector<1x128xf32>
    %19 = arith.subf %10, %18 : vector<1x128xf32>
    %cst_6 = arith.constant 1.000000e+00 : f32
    %20 = vector.broadcast %cst_6 : f32 to vector<1x128xf32>
    %21 = arith.cmpf oge, %19, %20 : vector<1x128xf32>
    %cst_7 = arith.constant 1.400000e+01 : f32
    %22 = vector.broadcast %cst_7 : f32 to vector<1x128xf32>
    %23 = arith.cmpf ole, %19, %22 : vector<1x128xf32>
    %cst_8 = arith.constant 1.000000e+00 : f32
    %24 = vector.broadcast %cst_8 : f32 to vector<1x128xf32>
    %25 = arith.cmpf oge, %13, %24 : vector<1x128xf32>
    %cst_9 = arith.constant 1.400000e+01 : f32
    %26 = vector.broadcast %cst_9 : f32 to vector<1x128xf32>
    %27 = arith.cmpf ole, %13, %26 : vector<1x128xf32>
    %28 = vector.extract_strided_slice %2 {offsets = [0, 0], sizes = [8, 128], strides = [1, 1]} : vector<8x256xf32> to vector<8x128xf32>
    %29 = arith.andi %21, %25 : vector<1x128xi1>
    %cst_10 = arith.constant 0.000000e+00 : f32
    %30 = vector.shape_cast %29 : vector<1x128xi1> to vector<1x128xi1>
    %31 = vector.broadcast %30 : vector<1x128xi1> to vector<8x128xi1>
    %32 = vector.broadcast %cst_10 : f32 to vector<8x128xf32>
    %33 = arith.select %31, %28, %32 : vector<8x128xi1>, vector<8x128xf32>
    %34 = vector.extract_strided_slice %2 {offsets = [0, 1], sizes = [8, 128], strides = [1, 1]} : vector<8x256xf32> to vector<8x128xf32>
    %cst_11 = arith.constant 0.000000e+00 : f32
    %35 = vector.shape_cast %21 : vector<1x128xi1> to vector<1x128xi1>
    %36 = vector.broadcast %35 : vector<1x128xi1> to vector<8x128xi1>
    %37 = vector.broadcast %cst_11 : f32 to vector<8x128xf32>
    %38 = arith.select %36, %34, %37 : vector<8x128xi1>, vector<8x128xf32>
    %39 = vector.extract_strided_slice %2 {offsets = [0, 2], sizes = [8, 128], strides = [1, 1]} : vector<8x256xf32> to vector<8x128xf32>
    %40 = arith.andi %21, %27 : vector<1x128xi1>
    %cst_12 = arith.constant 0.000000e+00 : f32
    %41 = vector.shape_cast %40 : vector<1x128xi1> to vector<1x128xi1>
    %42 = vector.broadcast %41 : vector<1x128xi1> to vector<8x128xi1>
    %43 = vector.broadcast %cst_12 : f32 to vector<8x128xf32>
    %44 = arith.select %42, %39, %43 : vector<8x128xi1>, vector<8x128xf32>
    %45 = vector.extract_strided_slice %2 {offsets = [0, 16], sizes = [8, 128], strides = [1, 1]} : vector<8x256xf32> to vector<8x128xf32>
    %cst_13 = arith.constant 0.000000e+00 : f32
    %46 = vector.shape_cast %25 : vector<1x128xi1> to vector<1x128xi1>
    %47 = vector.broadcast %46 : vector<1x128xi1> to vector<8x128xi1>
    %48 = vector.broadcast %cst_13 : f32 to vector<8x128xf32>
    %49 = arith.select %47, %45, %48 : vector<8x128xi1>, vector<8x128xf32>
    %50 = vector.extract_strided_slice %2 {offsets = [0, 17], sizes = [8, 128], strides = [1, 1]} : vector<8x256xf32> to vector<8x128xf32>
    %51 = vector.extract_strided_slice %2 {offsets = [0, 18], sizes = [8, 128], strides = [1, 1]} : vector<8x256xf32> to vector<8x128xf32>
    %cst_14 = arith.constant 0.000000e+00 : f32
    %52 = vector.shape_cast %27 : vector<1x128xi1> to vector<1x128xi1>
    %53 = vector.broadcast %52 : vector<1x128xi1> to vector<8x128xi1>
    %54 = vector.broadcast %cst_14 : f32 to vector<8x128xf32>
    %55 = arith.select %53, %51, %54 : vector<8x128xi1>, vector<8x128xf32>
    %56 = vector.extract_strided_slice %2 {offsets = [0, 32], sizes = [8, 128], strides = [1, 1]} : vector<8x256xf32> to vector<8x128xf32>
    %57 = arith.andi %23, %25 : vector<1x128xi1>
    %cst_15 = arith.constant 0.000000e+00 : f32
    %58 = vector.shape_cast %57 : vector<1x128xi1> to vector<1x128xi1>
    %59 = vector.broadcast %58 : vector<1x128xi1> to vector<8x128xi1>
    %60 = vector.broadcast %cst_15 : f32 to vector<8x128xf32>
    %61 = arith.select %59, %56, %60 : vector<8x128xi1>, vector<8x128xf32>
    %62 = vector.extract_strided_slice %2 {offsets = [0, 33], sizes = [8, 128], strides = [1, 1]} : vector<8x256xf32> to vector<8x128xf32>
    %cst_16 = arith.constant 0.000000e+00 : f32
    %63 = vector.shape_cast %23 : vector<1x128xi1> to vector<1x128xi1>
    %64 = vector.broadcast %63 : vector<1x128xi1> to vector<8x128xi1>
    %65 = vector.broadcast %cst_16 : f32 to vector<8x128xf32>
    %66 = arith.select %64, %62, %65 : vector<8x128xi1>, vector<8x128xf32>
    %67 = vector.extract_strided_slice %2 {offsets = [0, 34], sizes = [8, 128], strides = [1, 1]} : vector<8x256xf32> to vector<8x128xf32>
    %68 = arith.andi %23, %27 : vector<1x128xi1>
    %cst_17 = arith.constant 0.000000e+00 : f32
    %69 = vector.shape_cast %68 : vector<1x128xi1> to vector<1x128xi1>
    %70 = vector.broadcast %69 : vector<1x128xi1> to vector<8x128xi1>
    %71 = vector.broadcast %cst_17 : f32 to vector<8x128xf32>
    %72 = arith.select %70, %67, %71 : vector<8x128xi1>, vector<8x128xf32>
    %73 = tpu.concatenate %33, %38, %44, %49, %50, %55, %61, %66, %72 in 0 : vector<8x128xf32>, vector<8x128xf32>, vector<8x128xf32>, vector<8x128xf32>, vector<8x128xf32>, vector<8x128xf32>, vector<8x128xf32>, vector<8x128xf32>, vector<8x128xf32> -> vector<72x128xf32>
    %c0_18 = arith.constant 0 : index
    %c0_19 = arith.constant 0 : index
    %74 = vector.load %arg3[%c0_18, %c0_19] : memref<32x72xf32, #tpu.memory_space<vmem>>, vector<32x72xf32>
    %cst_20 = arith.constant dense<0.000000e+00> : vector<32x128xf32>
    %75 = tpu.matmul %74, %73, %cst_20 {dimension_numbers = #tpu.dot_dimension_numbers<[1], [0], [0], [1], [0, 0, 1, 1], [], []>} : vector<32x72xf32>, vector<72x128xf32>, vector<32x128xf32> -> vector<32x128xf32>
    %c0_21 = arith.constant 0 : index
    %c0_22 = arith.constant 0 : index
    %76 = vector.load %arg4[%c0_21, %c0_22] : memref<32x1xf32, #tpu.memory_space<vmem>>, vector<32x1xf32>
    %77 = vector.broadcast %76 : vector<32x1xf32> to vector<32x128xf32>
    %78 = arith.addf %75, %77 : vector<32x128xf32>
    %cst_23 = arith.constant 0.000000e+00 : f32
    %79 = vector.broadcast %cst_23 : f32 to vector<32x128xf32>
    %80 = arith.maximumf %78, %79 : vector<32x128xf32>
    %c0_24 = arith.constant 0 : index
    %c0_25 = arith.constant 0 : index
    %81 = vector.load %arg5[%c0_24, %c0_25] : memref<32x128xf32, #tpu.memory_space<vmem>>, vector<32x128xf32>
    tpu.vector_store %arg5[%c0_24, %c0_25], %80 {strides = array<i32>} : memref<32x128xf32, #tpu.memory_space<vmem>>, vector<32x128xf32>,
    return
  }
  func.func @transform_0(%arg0: i32) -> (i32, i32) {
    %c0_i32 = arith.constant 0 : i32
    %c0_i32_0 = arith.constant 0 : i32
    return %c0_i32, %arg0 : i32, i32
  }
  func.func @transform_1(%arg0: i32) -> (i32, i32) {
    %c1_i32 = arith.constant 1 : i32
    %0 = arith.addi %arg0, %c1_i32 : i32
    %c0_i32 = arith.constant 0 : i32
    %c0_i32_0 = arith.constant 0 : i32
    return %c0_i32, %0 : i32, i32
  }
  func.func @transform_2(%arg0: i32) -> (i32, i32) {
    %c0_i32 = arith.constant 0 : i32
    %c0_i32_0 = arith.constant 0 : i32
    %c0_i32_1 = arith.constant 0 : i32
    return %c0_i32, %c0_i32_0 : i32, i32
  }
  func.func @transform_3(%arg0: i32) -> (i32, i32) {
    %c0_i32 = arith.constant 0 : i32
    %c0_i32_0 = arith.constant 0 : i32
    %c0_i32_1 = arith.constant 0 : i32
    return %c0_i32, %c0_i32_0 : i32, i32
  }
  func.func @transform_4(%arg0: i32) -> (i32, i32) {
    %c0_i32 = arith.constant 0 : i32
    %c0_i32_0 = arith.constant 0 : i32
    return %c0_i32, %arg0 : i32, i32
  }
}

</mosaic_0001>

<llo_original>
// kernel: neg.1
$region0: #{neg.1}
  #allocation0 [shape = 's32[1]{0}', space=sflag, size = 0x4, scoped, tag = 'scoped memory for neg.1']
  %s0 = inlined_call_operand.vmem [shape: f32[4,9,16], index: 0, kind: input, shape index: {}]
  %s1 = inlined_call_operand.vmem [shape: f32[4,9,16], index: 1, kind: output, shape index: {}]
  %v2 = vld [vmem:[%s0] sm:$0xff]
  %3 = xla_tuple %v2
  %4 = xla_tuple %3
  %v5 = vxor.u32 %v2, 2147483648
  %6 = xla_tuple %v5
  %7 = vst [vmem:[%s1] sm:$0xff] %v5
  %s8 = scalar_lea.vmem %s0, 16
  %v9 = vld [vmem:[%s8] sm:$0xff]
  %10 = xla_tuple %v9
  %11 = xla_tuple %10
  %v12 = vxor.u32 %v9, 2147483648
  %13 = xla_tuple %v12
  %s14 = scalar_lea.vmem %s1, 16
  %15 = vst [vmem:[%s14] sm:$0xff] %v12
  %s16 = scalar_lea.vmem %s0, 32
  %v17 = vld [vmem:[%s16] sm:$0xff]
  %18 = xla_tuple %v17
  %19 = xla_tuple %18
  %v20 = vxor.u32 %v17, 2147483648
  %21 = xla_tuple %v20
  %s22 = scalar_lea.vmem %s1, 32
  %23 = vst [vmem:[%s22] sm:$0xff] %v20
  %s24 = scalar_lea.vmem %s0, 48
  %v25 = vld [vmem:[%s24] sm:$0xff]
  %26 = xla_tuple %v25
  %27 = xla_tuple %26
  %v28 = vxor.u32 %v25, 2147483648
  %29 = xla_tuple %v28
  %s30 = scalar_lea.vmem %s1, 48
  %31 = vst [vmem:[%s30] sm:$0xff] %v28
  %s32 = scalar_lea.vmem %s0, 64
  %v33 = vld [vmem:[%s32] sm:$0xff]
  %34 = xla_tuple %v33
  %35 = xla_tuple %34
  %v36 = vxor.u32 %v33, 2147483648
  %37 = xla_tuple %v36
  %s38 = scalar_lea.vmem %s1, 64
  %39 = vst [vmem:[%s38] sm:$0xff] %v36
  %s40 = scalar_lea.vmem %s0, 80
  %v41 = vld [vmem:[%s40] sm:$0xff]
  %42 = xla_tuple %v41
  %43 = xla_tuple %42
  %v44 = vxor.u32 %v41, 2147483648
  %45 = xla_tuple %v44
  %s46 = scalar_lea.vmem %s1, 80
  %47 = vst [vmem:[%s46] sm:$0xff] %v44
  %s48 = scalar_lea.vmem %s0, 96
  %v49 = vld [vmem:[%s48] sm:$0xff]
  %50 = xla_tuple %v49
  %51 = xla_tuple %50
  %v52 = vxor.u32 %v49, 2147483648
  %53 = xla_tuple %v52
  %s54 = scalar_lea.vmem %s1, 96
  %55 = vst [vmem:[%s54] sm:$0xff] %v52
  %s56 = scalar_lea.vmem %s0, 112
  %v57 = vld [vmem:[%s56] sm:$0xff]
  %58 = xla_tuple %v57
  %59 = xla_tuple %58
  %v60 = vxor.u32 %v57, 2147483648
  %61 = xla_tuple %v60
  %s62 = scalar_lea.vmem %s1, 112
  %63 = vst [vmem:[%s62] sm:$0xff] %v60
  %s64 = scalar_lea.vmem %s0, 128
  %v65 = vld [vmem:[%s64] sm:$0xff]
  %66 = xla_tuple %v65
  %67 = xla_tuple %66
  %v68 = vxor.u32 %v65, 2147483648
  %69 = xla_tuple %v68
  %s70 = scalar_lea.vmem %s1, 128
  %71 = vst [vmem:[%s70] sm:$0xff] %v68
  %s72 = scalar_lea.vmem %s0, 8
  %v73 = vld [vmem:[%s72] sm:$0xff]
  %74 = xla_tuple %v73
  %75 = xla_tuple %74
  %v76 = vxor.u32 %v73, 2147483648
  %77 = xla_tuple %v76
  %s78 = scalar_lea.vmem %s1, 8
  %79 = vst [vmem:[%s78] sm:$0xff] %v76
  %s80 = scalar_lea.vmem %s0, 24
  %v81 = vld [vmem:[%s80] sm:$0xff]
  %82 = xla_tuple %v81
  %83 = xla_tuple %82
  %v84 = vxor.u32 %v81, 2147483648
  %85 = xla_tuple %v84
  %s86 = scalar_lea.vmem %s1, 24
  %87 = vst [vmem:[%s86] sm:$0xff] %v84
  %s88 = scalar_lea.vmem %s0, 40
  %v89 = vld [vmem:[%s88] sm:$0xff]
  %90 = xla_tuple %v89
  %91 = xla_tuple %90
  %v92 = vxor.u32 %v89, 2147483648
  %93 = xla_tuple %v92
  %s94 = scalar_lea.vmem %s1, 40
  %95 = vst [vmem:[%s94] sm:$0xff] %v92
  %s96 = scalar_lea.vmem %s0, 56
  %v97 = vld [vmem:[%s96] sm:$0xff]
  %98 = xla_tuple %v97
  %99 = xla_tuple %98
  %v100 = vxor.u32 %v97, 2147483648
  %101 = xla_tuple %v100
  %s102 = scalar_lea.vmem %s1, 56
  %103 = vst [vmem:[%s102] sm:$0xff] %v100
  %s104 = scalar_lea.vmem %s0, 72
  %v105 = vld [vmem:[%s104] sm:$0xff]
  %106 = xla_tuple %v105
  %107 = xla_tuple %106
  %v108 = vxor.u32 %v105, 2147483648
  %109 = xla_tuple %v108
  %s110 = scalar_lea.vmem %s1, 72
  %111 = vst [vmem:[%s110] sm:$0xff] %v108
  %s112 = scalar_lea.vmem %s0, 88
  %v113 = vld [vmem:[%s112] sm:$0xff]
  %114 = xla_tuple %v113
  %115 = xla_tuple %114
  %v116 = vxor.u32 %v113, 2147483648
  %117 = xla_tuple %v116
  %s118 = scalar_lea.vmem %s1, 88
  %119 = vst [vmem:[%s118] sm:$0xff] %v116
  %s120 = scalar_lea.vmem %s0, 104
  %v121 = vld [vmem:[%s120] sm:$0xff]
  %122 = xla_tuple %v121
  %123 = xla_tuple %122
  %v124 = vxor.u32 %v121, 2147483648
  %125 = xla_tuple %v124
  %s126 = scalar_lea.vmem %s1, 104
  %127 = vst [vmem:[%s126] sm:$0xff] %v124
  %s128 = scalar_lea.vmem %s0, 120
  %v129 = vld [vmem:[%s128] sm:$0xff]
  %130 = xla_tuple %v129
  %131 = xla_tuple %130
  %v132 = vxor.u32 %v129, 2147483648
  %133 = xla_tuple %v132
  %s134 = scalar_lea.vmem %s1, 120
  %135 = vst [vmem:[%s134] sm:$0xff] %v132
  %s136 = scalar_lea.vmem %s0, 136
  %v137 = vld [vmem:[%s136] sm:$0xff]
  %138 = xla_tuple %v137
  %139 = xla_tuple %138
  %v140 = vxor.u32 %v137, 2147483648
  %141 = xla_tuple %v140
  %s142 = scalar_lea.vmem %s1, 136
  %143 = vst [vmem:[%s142] sm:$0xff] %v140

// kernel: _up4_forward_impl.1
$region0: #{_up4_forward_impl.1}
  #allocation0 [shape = 'u32[]', space=smem, size = 0x4, offset = 0x4, fixed_abs, tag = 'smem constant byte address 0x4 - core index']
  #allocation1 [shape = 'u32[72,128]{1,0:T(1,128)}', space=vmem, size = 0x9000, scoped, tag = 'internal scratch']
  %s0 = inlined_call_operand.vmem [shape: f32[8,640], index: 0, kind: input, shape index: {}, may-alias: {0,1}]
  %s1 = inlined_call_operand.vmem [shape: f32[8,640], index: 1, kind: input, shape index: {}, may-alias: {0,1}]
  %s2 = inlined_call_operand.vmem [shape: f32[32,72], index: 2, kind: input, shape index: {}]
  %s3 = inlined_call_operand.vmem [shape: f32[32,1], index: 3, kind: input, shape index: {}]
  %s4 = inlined_call_operand.vmem [shape: f32[32,512], index: 4, kind: output, shape index: {}]
  %s5 = sld [smem:[#allocation0]]
  $region83: #{_up4_forward_impl.1} parent=0
    _
  %s7 = ssub.s32 1, %s5
  %s8 = scalar_select 0, %s7, %s5
  $region1: #{_up4_forward_impl.1} parent=0
    #allocation2 [shape = 'u8[32768]{0}', space=vmem, size = 0x8000, scoped, tag = 'output window, operand 0']
    loop: start=0, step=1, limit=6
    $region2: #{_up4_forward_impl.1} parent=1 // loop_pre_header
      _
    $region3: #{_up4_forward_impl.1} parent=1 // loop_header
      %s10 = sphi 0, %s14
      %p11 = scmp.ge.s32.totalorder %s10, 6
      %s20 = sphi 0, %s22
      %s23 = sphi 0, %s20
      %s24 = sphi 0, %s23
      %s40 = sphi 0, %s24
      %s48 = sphi 0, %s50
      %s51 = sphi 0, %s48
      %s52 = sphi 0, %s51
      %s68 = sphi 0, %s52
      %s72 = sphi 0, %s72
      %s74 = sphi 0, %s72
      %s75 = sphi 0, %s74
      %s89 = sphi 0, %s75
      %s93 = sphi 0, %s93
      %s95 = sphi 0, %s93
      %s96 = sphi 0, %s95
      %s110 = sphi 0, %s96
      %s116 = sphi 0, %s118
      %s119 = sphi 0, %s116
      %s120 = sphi 0, %s119
      %s136 = sphi 0, %s120
    $region4: #{_up4_forward_impl.1} parent=1 // loop_header_branch
      %13 = sbr.rel (%p11) target = $region8
    $region5: #{_up4_forward_impl.1} parent=1 // loop_body
      %s15 = ssub.s32 %s10, 1
      %s16 = ssub.s32 %s10, 2
      %s17 = sadd.s32 %s10, 1
      %s18 = ssub.s32 %s10, %s17
      %p19 = scmp.eq.s32.totalorder %s18, 0
      %s21 = sadd.s32 %s20, 1
      %s22 = scalar_select %p19, %s20, %s21
      %p25 = pneg %p19
      %p26 = scmp.eq.s32.totalorder %s10, 3
      %p27 = por %p25, %p26
      %p28 = scmp.ne.s32.totalorder %s20, %s23
      %p29 = scmp.eq.s32.totalorder %s10, 0
      %p30 = por %p28, %p29
      %p31 = scmp.ne.s32.totalorder %s20, %s23
      %p32 = scmp.eq.s32.totalorder %s15, 3
      %p33 = por %p31, %p32
      %p34 = scmp.ne.s32.totalorder %s23, %s24
      %p35 = scmp.eq.s32.totalorder %s15, 0
      %p36 = por %p34, %p35
      %p37 = scmp.ne.s32.totalorder %s23, %s24
      %p38 = scmp.eq.s32.totalorder %s16, 3
      %p39 = por %p37, %p38
      %p41 = scmp.ne.s32.totalorder %s24, %s40
      %p42 = scmp.eq.s32.totalorder %s16, 0
      %p43 = por %p41, %p42
      %s44 = sadd.s32 %s10, 1
      %s45 = sadd.s32 %s17, 1
      %s46 = ssub.s32 %s44, %s45
      %p47 = scmp.eq.s32.totalorder %s46, 0
      %s49 = sadd.s32 %s48, 1
      %s50 = scalar_select %p47, %s48, %s49
      %p53 = pneg %p47
      %p54 = scmp.eq.s32.totalorder %s10, 3
      %p55 = por %p53, %p54
      %p56 = scmp.ne.s32.totalorder %s48, %s51
      %p57 = scmp.eq.s32.totalorder %s10, 0
      %p58 = por %p56, %p57
      %p59 = scmp.ne.s32.totalorder %s48, %s51
      %p60 = scmp.eq.s32.totalorder %s15, 3
      %p61 = por %p59, %p60
      %p62 = scmp.ne.s32.totalorder %s51, %s52
      %p63 = scmp.eq.s32.totalorder %s15, 0
      %p64 = por %p62, %p63
      %p65 = scmp.ne.s32.totalorder %s51, %s52
      %p66 = scmp.eq.s32.totalorder %s16, 3
      %p67 = por %p65, %p66
      %p69 = scmp.ne.s32.totalorder %s52, %s68
      %p70 = scmp.eq.s32.totalorder %s16, 0
      %p71 = por %p69, %p70
      %s73 = sadd.s32 %s72, 1
      %p76 = scmp.eq.s32.totalorder %s10, 3
      %p77 = scmp.ne.s32.totalorder %s72, %s74
      %p78 = scmp.eq.s32.totalorder %s10, 0
      %p79 = por %p77, %p78
      %p80 = scmp.ne.s32.totalorder %s72, %s74
      %p81 = scmp.eq.s32.totalorder %s15, 3
      %p82 = por %p80, %p81
      %p83 = scmp.ne.s32.totalorder %s74, %s75
      %p84 = scmp.eq.s32.totalorder %s15, 0
      %p85 = por %p83, %p84
      %p86 = scmp.ne.s32.totalorder %s74, %s75
      %p87 = scmp.eq.s32.totalorder %s16, 3
      %p88 = por %p86, %p87
      %p90 = scmp.ne.s32.totalorder %s75, %s89
      %p91 = scmp.eq.s32.totalorder %s16, 0
      %p92 = por %p90, %p91
      %s94 = sadd.s32 %s93, 1
      %p97 = scmp.eq.s32.totalorder %s10, 3
      %p98 = scmp.ne.s32.totalorder %s93, %s95
      %p99 = scmp.eq.s32.totalorder %s10, 0
      %p100 = por %p98, %p99
      %p101 = scmp.ne.s32.totalorder %s93, %s95
      %p102 = scmp.eq.s32.totalorder %s15, 3
      %p103 = por %p101, %p102
      %p104 = scmp.ne.s32.totalorder %s95, %s96
      %p105 = scmp.eq.s32.totalorder %s15, 0
      %p106 = por %p104, %p105
      %p107 = scmp.ne.s32.totalorder %s95, %s96
      %p108 = scmp.eq.s32.totalorder %s16, 3
      %p109 = por %p107, %p108
      %p111 = scmp.ne.s32.totalorder %s96, %s110
      %p112 = scmp.eq.s32.totalorder %s16, 0
      %p113 = por %p111, %p112
      %s114 = ssub.s32 %s10, %s17
      %p115 = scmp.eq.s32.totalorder %s114, 0
      %s117 = sadd.s32 %s116, 1
      %s118 = scalar_select %p115, %s116, %s117
      %p121 = pneg %p115
      %p122 = scmp.eq.s32.totalorder %s10, 3
      %p123 = por %p121, %p122
      %p124 = scmp.ne.s32.totalorder %s116, %s119
      %p125 = scmp.eq.s32.totalorder %s10, 0
      %p126 = por %p124, %p125
      %p127 = scmp.ne.s32.totalorder %s116, %s119
      %p128 = scmp.eq.s32.totalorder %s15, 3
      %p129 = por %p127, %p128
      %p130 = scmp.ne.s32.totalorder %s119, %s120
      %p131 = scmp.eq.s32.totalorder %s15, 0
      %p132 = por %p130, %p131
      %p133 = scmp.ne.s32.totalorder %s119, %s120
      %p134 = scmp.eq.s32.totalorder %s16, 3
      %p135 = por %p133, %p134
      %p137 = scmp.ne.s32.totalorder %s120, %s136
      %p138 = scmp.eq.s32.totalorder %s16, 0
      %p139 = por %p137, %p138
      %p140 = scmp.le.s32.totalorder 1, %s10
      %p141 = scmp.lt.s32.totalorder %s10, 5
      %p142 = pnand %p140, %p141
      %p143 = pneg %p142
      // Predicated region
      $region9: #{_up4_forward_impl.1} parent=5 // pred_check
        _
      $region10: #{_up4_forward_impl.1} parent=5 // pred_check_branch
        %145 = sbr.rel (%p142) target = $region12
      $region11: #{_up4_forward_impl.1} parent=5 // pred_region
        %s146 = ssub.s32 %s10, 1
        // Predicated region
        $region13: #{_up4_forward_impl.1} parent=11 // pred_check
          %p147 = pneg %p85
        $region14: #{_up4_forward_impl.1} parent=11 // pred_check_branch
          %149 = sbr.rel (%p147) target = $region16
        $region15: #{_up4_forward_impl.1} parent=11 // pred_region
          _
        $region16: #{_up4_forward_impl.1} parent=11 // pred_fallthru
          _
        // Predicated region
        $region17: #{_up4_forward_impl.1} parent=11 // pred_check
          %p150 = pneg %p106
        $region18: #{_up4_forward_impl.1} parent=11 // pred_check_branch
          %152 = sbr.rel (%p150) target = $region20
        $region19: #{_up4_forward_impl.1} parent=11 // pred_region
          _
        $region20: #{_up4_forward_impl.1} parent=11 // pred_fallthru
          _
      $region12: #{_up4_forward_impl.1} parent=5 // pred_fallthru
        _
      %p153 = scmp.lt.s32.totalorder %s10, 4
      // Predicated region
      $region21: #{_up4_forward_impl.1} parent=5 // pred_check
        %p154 = pneg %p153
      $region22: #{_up4_forward_impl.1} parent=5 // pred_check_branch
        %156 = sbr.rel (%p154) target = $region24
      $region23: #{_up4_forward_impl.1} parent=5 // pred_region
        // Predicated region
        $region25: #{_up4_forward_impl.1} parent=23 // pred_check
          %p157 = pneg %p30
        $region26: #{_up4_forward_impl.1} parent=23 // pred_check_branch
          %159 = sbr.rel (%p157) target = $region28
        $region27: #{_up4_forward_impl.1} parent=23 // pred_region
          %p160 = scmp.lt.s32.totalorder %s10, 4
          %s161 = scalar_select %p160, %s10, 4
          %s162 = smul.addr %s161, 8
          %s163 = scalar_lea.vmem %s0, %s162
        $region28: #{_up4_forward_impl.1} parent=23 // pred_fallthru
          _
        // Predicated region
        $region29: #{_up4_forward_impl.1} parent=23 // pred_check
          %p164 = pneg %p58
        $region30: #{_up4_forward_impl.1} parent=23 // pred_check_branch
          %166 = sbr.rel (%p164) target = $region32
        $region31: #{_up4_forward_impl.1} parent=23 // pred_region
          %s167 = sadd.s32 %s10, 1
          %p168 = scmp.lt.s32.totalorder %s167, 4
          %s169 = scalar_select %p168, %s167, 4
          %s170 = smul.addr %s169, 8
          %s171 = scalar_lea.vmem %s1, %s170
          %s172 = sadd.s32 %s10, 1
        $region32: #{_up4_forward_impl.1} parent=23 // pred_fallthru
          _
      $region24: #{_up4_forward_impl.1} parent=5 // pred_fallthru
        _
      %p173 = scmp.le.s32.totalorder 1, %s10
      %p174 = scmp.lt.s32.totalorder %s10, 5
      %p175 = pnand %p173, %p174
      %p176 = pneg %p175
      // Predicated region
      $region33: #{_up4_forward_impl.1} parent=5 // pred_check
        _
      $region34: #{_up4_forward_impl.1} parent=5 // pred_check_branch
        %178 = sbr.rel (%p175) target = $region36
      $region35: #{_up4_forward_impl.1} parent=5 // pred_region
        %s179 = ssub.s32 %s10, 1
        %p180 = scmp.lt.s32.totalorder %s15, 4
        %s181 = scalar_select %p180, %s15, 4
        %s182 = smul.addr %s181, 8
        %s183 = scalar_lea.vmem %s0, %s182
        %p184 = pneg %p36
        %p185 = pneg %p33
        %s186 = sadd.s32 %s15, 1
        %p187 = scmp.lt.s32.totalorder %s186, 4
        %s188 = scalar_select %p187, %s186, 4
        %s189 = smul.addr %s188, 8
        %s190 = scalar_lea.vmem %s1, %s189
        %p191 = pneg %p64
        %p192 = pneg %p61
        %p193 = pneg %p85
        %p194 = pneg %p82
        %p195 = pneg %p106
        %p196 = pneg %p103
        %p197 = pneg %p132
        %p198 = pneg %p129
        %s199 = sand.u32 %s119, 1
        %s200 = sand.u32 %s119, 1
        %s201 = smul.addr %s200, 32
        %s202 = scalar_lea.vmem [#allocation2], %s201
        %p203 = scmp.lt.s32.totalorder %s15, 4
        %s204 = scalar_select %p203, %s15, 4
        %s205 = smul.addr %s204, 8
        %s206 = scalar_lea.vmem %s0, %s205
        %s207 = sadd.s32 %s15, 1
        %p208 = scmp.lt.s32.totalorder %s207, 4
        %s209 = scalar_select %p208, %s207, 4
        %s210 = smul.addr %s209, 8
        %s211 = scalar_lea.vmem %s1, %s210
        %s212 = sadd.s32 %s15, 1
        %v213 = vld [vmem:[%s206] sm:$0xff]
        %v214 = vld [vmem:[%s211] sm:$0xff]
        %v215 = vlaneseq
        %v216 = vand.u32 %v215, 127
        %s217 = smul.u32 %s15, 128
        %v218 = vstv %s217
        %v219 = vadd.s32 %v216, %v218
        %v220 = vcvt.s32.f32 %v219
        %v221 = vrcp.pop 16.0
        %v222 = vmul.f32 16.0, %v221
        %v223 = vsub.f32 1.0, %v222
        %v224 = vmul.f32 %v221, %v223
        %v225 = vadd.f32 %v221, %v224
        %vm226 = vweird.f32 %v221
        %v227 = vsel %vm226, %v221, %v225
        %v228 = vmul.f32 %v220, %v227
        %v229 = vfloor.f32 %v228
        %v230 = vmul.f32 %v229, 16.0
        %v231 = vsub.f32 %v220, %v230
        %v232 = vmul.f32 %v229, %v227
        %v233 = vfloor.f32 %v232
        %v234 = vmul.f32 %v233, 16.0
        %v235 = vsub.f32 %v229, %v234
        %vm236 = vcmp.ge.f32.partialorder %v235, 1.0
        %vm237 = vcmp.le.f32.partialorder %v235, 14.0
        %vm238 = vcmp.ge.f32.partialorder %v231, 1.0
        %vm239 = vcmp.le.f32.partialorder %v231, 14.0
        %vm240 = vmand %vm236, %vm238
        %v241 = vsel %vm240, 1, 0
        %vm242 = vcmp.eq.s32.totalorder %v241, 1
        %v243 = vsel %vm242, %v213, 0.0
        %v244 = vsel %vm236, 1, 0
        %vm245 = vcmp.eq.s32.totalorder %v244, 1
        %248 = vrot.lane.b32.xlu0 %v213, 127
        %v249 = vpop.permute.xlu0 %248
        %250 = vrot.lane.b32.xlu0 %v214, 127
        %v251 = vpop.permute.xlu0 %250
        %vm252 = vcmask 1039360
        %v253 = vsel %vm252, %v249, %v251
        %v255 = vsel %vm245, %v253, 0.0
        %vm256 = vmand %vm236, %vm239
        %v257 = vsel %vm256, 1, 0
        %vm258 = vcmp.eq.s32.totalorder %v257, 1
        %259 = vrot.lane.b32.xlu0 %v213, 126
        %v260 = vpop.permute.xlu0 %259
        %261 = vrot.lane.b32.xlu0 %v214, 126
        %v262 = vpop.permute.xlu0 %261
        %vm263 = vcmask 1031168
        %v264 = vsel %vm263, %v260, %v262
        %v266 = vsel %vm258, %v264, 0.0
        %v267 = vsel %vm238, 1, 0
        %vm268 = vcmp.eq.s32.totalorder %v267, 1
        %269 = vrot.lane.b32.xlu0 %v213, 112
        %v270 = vpop.permute.xlu0 %269
        %271 = vrot.lane.b32.xlu0 %v214, 112
        %v272 = vpop.permute.xlu0 %271
        %vm273 = vcmask 916480
        %v274 = vsel %vm273, %v270, %v272
        %v276 = vsel %vm268, %v274, 0.0
        %v277 = vsel %vm239, 1, 0
        %vm278 = vcmp.eq.s32.totalorder %v277, 1
        %279 = vrot.lane.b32.xlu0 %v213, 110
        %v280 = vpop.permute.xlu0 %279
        %281 = vrot.lane.b32.xlu0 %v214, 110
        %v282 = vpop.permute.xlu0 %281
        %vm283 = vcmask 900096
        %v284 = vsel %vm283, %v280, %v282
        %v286 = vsel %vm278, %v284, 0.0
        %vm287 = vmand %vm237, %vm238
        %v288 = vsel %vm287, 1, 0
        %vm289 = vcmp.eq.s32.totalorder %v288, 1
        %290 = vrot.lane.b32.xlu0 %v213, 96
        %v291 = vpop.permute.xlu0 %290
        %292 = vrot.lane.b32.xlu0 %v214, 96
        %v293 = vpop.permute.xlu0 %292
        %vm294 = vcmask 785408
        %v295 = vsel %vm294, %v291, %v293
        %v297 = vsel %vm289, %v295, 0.0
        %v298 = vsel %vm237, 1, 0
        %vm299 = vcmp.eq.s32.totalorder %v298, 1
        %300 = vrot.lane.b32.xlu0 %v213, 95
        %v301 = vpop.permute.xlu0 %300
        %302 = vrot.lane.b32.xlu0 %v214, 95
        %v303 = vpop.permute.xlu0 %302
        %vm304 = vcmask 777216
        %v305 = vsel %vm304, %v301, %v303
        %v307 = vsel %vm299, %v305, 0.0
        %vm308 = vmand %vm237, %vm239
        %v309 = vsel %vm308, 1, 0
        %vm310 = vcmp.eq.s32.totalorder %v309, 1
        %311 = vrot.lane.b32.xlu0 %v213, 94
        %v312 = vpop.permute.xlu0 %311
        %313 = vrot.lane.b32.xlu0 %v214, 94
        %v314 = vpop.permute.xlu0 %313
        %vm315 = vcmask 769024
        %v316 = vsel %vm315, %v312, %v314
        %v318 = vsel %vm310, %v316, 0.0
        %319 = vrot.lane.b32.xlu0 %v213, 111
        %v320 = vpop.permute.xlu0 %319
        %321 = vrot.lane.b32.xlu0 %v214, 111
        %v322 = vpop.permute.xlu0 %321
        %vm323 = vcmask 908288
        %v324 = vsel %vm323, %v320, %v322
        %v326 = vld [vmem:[%s2] sm:$0xff]
        %v327 = vld [vmem:[%s2 + $0x8] sm:$0xff]
        %v328 = vld [vmem:[%s2 + $0x10] sm:$0xff]
        %v329 = vld [vmem:[%s2 + $0x18] sm:$0xff]
        %v330 = vld [vmem:[%s3] sm:$0xff]
        %v331 = vld [vmem:[%s3 + $0x8] sm:$0xff]
        %v332 = vld [vmem:[%s3 + $0x10] sm:$0xff]
        %v333 = vld [vmem:[%s3 + $0x18] sm:$0xff]
        %335 = vset.pattern.permute.xlu0 0
        %336 = vperm.xlu0 %335, %v330
        %v337 = vpop.permute.xlu0 %336
        %340 = vset.pattern.permute.xlu0 0
        %341 = vperm.xlu0 %340, %v331
        %v342 = vpop.permute.xlu0 %341
        %345 = vset.pattern.permute.xlu0 0
        %346 = vperm.xlu0 %345, %v332
        %v347 = vpop.permute.xlu0 %346
        %350 = vset.pattern.permute.xlu0 0
        %351 = vperm.xlu0 %350, %v333
        %v352 = vpop.permute.xlu0 %351
        %vm354 = vcmask 588800
        %v356 = vsel %vm354, %v326, 0
        %v359 = vsel %vm354, %v327, 0
        %v362 = vsel %vm354, %v328, 0
        %v365 = vsel %vm354, %v329, 0
        %367 = vmatpush.msra.mxu0 0.0
        %368 = vmatpush.msra.mxu0 0.0
        %369 = vmatpush.msra.mxu0 0.0
        %370 = vmatpush.msra.mxu0 0.0
        %371 = vmatpush.msra.mxu0 0.0
        %372 = vmatpush.msra.mxu0 0.0
        %373 = vmatpush.msra.mxu0 0.0
        %374 = vmatpush.msra.mxu0 %v318
        %375 = vmatpush.msra.mxu0 %v307
        %376 = vmatpush.msra.mxu0 %v297
        %377 = vmatpush.msra.mxu0 %v286
        %378 = vmatpush.msra.mxu0 %v324
        %379 = vmatpush.msra.mxu0 %v276
        %380 = vmatpush.msra.mxu0 %v266
        %381 = vmatpush.msra.mxu0 %v255
        %382 = vmatpush.msra.mxu0 %v243
        %383 = vmatmul.f32.gmra.mxu0 %v356
        %v384 = vpop.f32.mrf.mxu0
        %v385 = vadd.f32 %v337, %v384
        %386 = vmatmul.f32.gmra.mxu0 %v359
        %v387 = vpop.f32.mrf.mxu0
        %v388 = vadd.f32 %v342, %v387
        %389 = vmatmul.f32.gmra.mxu0 %v362
        %v390 = vpop.f32.mrf.mxu0
        %v391 = vadd.f32 %v347, %v390
        %392 = vmatmul.f32.gmra.mxu0 %v365
        %v393 = vpop.f32.mrf.mxu0
        %v394 = vadd.f32 %v352, %v393
        %395 = vdwg.mxu0
        %v396 = vmax.f32 %v385, 0.0
        %v397 = vmax.f32 %v388, 0.0
        %v398 = vmax.f32 %v391, 0.0
        %v399 = vmax.f32 %v394, 0.0
        %400 = vst [vmem:[%s202] sm:$0xff] %v396
        %401 = vst [vmem:[%s202 + $0x8] sm:$0xff] %v397
        %402 = vst [vmem:[%s202 + $0x10] sm:$0xff] %v398
        %403 = vst [vmem:[%s202 + $0x18] sm:$0xff] %v399
        %s404 = sand.u32 %s119, 1
        %s405 = sand.u32 %s119, 1
        %s406 = smul.addr %s405, 32
        %s407 = scalar_lea.vmem [#allocation2], %s406
        // Predicated region
        $region37: #{_up4_forward_impl.1} parent=35 // pred_check
          %p408 = pneg %p129
        $region38: #{_up4_forward_impl.1} parent=35 // pred_check_branch
          %410 = sbr.rel (%p408) target = $region40
        $region39: #{_up4_forward_impl.1} parent=35 // pred_region
          %s411 = smul.addr %s15, 8
          %s412 = scalar_lea.vmem %s4, %s411
          // Predicated region
          $region41: #{_up4_forward_impl.1} parent=39 // pred_check
            _
          $region42: #{_up4_forward_impl.1} parent=39 // pred_check_branch
            %414 = sbr.rel (0) target = $region44
          $region43: #{_up4_forward_impl.1} parent=39 // pred_region
            // Predicated region
            $region45: #{_up4_forward_impl.1} parent=43 // pred_check
              _
            $region46: #{_up4_forward_impl.1} parent=43 // pred_check_branch
              %416 = sbr.rel (0) target = $region48
            $region47: #{_up4_forward_impl.1} parent=43 // pred_region
              // Predicated region
              $region60: #{_up4_forward_impl.1} parent=47 // pred_check
                _
              $region61: #{_up4_forward_impl.1} parent=47 // pred_check_branch
                %438 = sbr.rel (0) target = $region63
              $region62: #{_up4_forward_impl.1} parent=47 // pred_region
                loop: start=0, step=1, limit=1
                $region64: #{_up4_forward_impl.1} parent=62 // loop_pre_header
                  _
                $region65: #{_up4_forward_impl.1} parent=62 // loop_header
                  %s440 = sphi 0, %s444
                  %p441 = scmp.ge.s32.totalorder %s440, 1
                  %s445 = sphi %s407, %s407
                  %s446 = sphi %s412, %s412
                $region66: #{_up4_forward_impl.1} parent=62 // loop_header_branch
                  %443 = sbr.rel (%p441) target = $region70
                $region67: #{_up4_forward_impl.1} parent=62 // loop_body
                  %v447 = vld [vmem:[%s445] sm:$0xff]
                  %448 = vst [vmem:[%s446] sm:$0xff] %v447
                  %v449 = vld [vmem:[%s445 + $0x8] sm:$0xff]
                  %450 = vst [vmem:[%s446 + $0x20] sm:$0xff] %v449
                  %v451 = vld [vmem:[%s445 + $0x10] sm:$0xff]
                  %452 = vst [vmem:[%s446 + $0x40] sm:$0xff] %v451
                  %v453 = vld [vmem:[%s445 + $0x18] sm:$0xff]
                  %454 = vst [vmem:[%s446 + $0x60] sm:$0xff] %v453
                $region68: #{_up4_forward_impl.1} parent=62 // loop_footer
                  %s444 = sadd.s32 1, %s440
                $region69: #{_up4_forward_impl.1} parent=62 // loop_footer_branch
                  %439 = sbr.rel target = $region65
                $region70: #{_up4_forward_impl.1} parent=62 // loop_exit
                  _
              $region63: #{_up4_forward_impl.1} parent=47 // pred_fallthru
                _
              // Predicated region
              $region71: #{_up4_forward_impl.1} parent=47 // pred_check
                _
              $region72: #{_up4_forward_impl.1} parent=47 // pred_check_branch
                %456 = sbr.rel target = $region74
              $region73: #{_up4_forward_impl.1} parent=47 // pred_region
                _
              $region74: #{_up4_forward_impl.1} parent=47 // pred_fallthru
                _
            $region48: #{_up4_forward_impl.1} parent=43 // pred_fallthru
              _
            // Predicated region
            $region49: #{_up4_forward_impl.1} parent=43 // pred_check
              _
            $region50: #{_up4_forward_impl.1} parent=43 // pred_check_branch
              %418 = sbr.rel target = $region52
            $region51: #{_up4_forward_impl.1} parent=43 // pred_region
              %s420 = ssub.s32 256, 1
              loop: start=0, step=1, limit=1
              $region53: #{_up4_forward_impl.1} parent=51 // loop_pre_header
                _
              $region54: #{_up4_forward_impl.1} parent=51 // loop_header
                %s422 = sphi 0, %s426
                %p423 = scmp.ge.s32.totalorder %s422, 1
                %s427 = sphi %s407, %s407
                %s428 = sphi %s412, %s412
              $region55: #{_up4_forward_impl.1} parent=51 // loop_header_branch
                %425 = sbr.rel (%p423) target = $region59
              $region56: #{_up4_forward_impl.1} parent=51 // loop_body
                %v429 = vld [vmem:[%s427] sm:%s420]
                %430 = vst [vmem:[%s428] sm:%s420] %v429
                %v431 = vld [vmem:[%s427 + $0x8] sm:%s420]
                %432 = vst [vmem:[%s428 + $0x20] sm:%s420] %v431
                %v433 = vld [vmem:[%s427 + $0x10] sm:%s420]
                %434 = vst [vmem:[%s428 + $0x40] sm:%s420] %v433
                %v435 = vld [vmem:[%s427 + $0x18] sm:%s420]
                %436 = vst [vmem:[%s428 + $0x60] sm:%s420] %v435
              $region57: #{_up4_forward_impl.1} parent=51 // loop_footer
                %s426 = sadd.s32 1, %s422
              $region58: #{_up4_forward_impl.1} parent=51 // loop_footer_branch
                %421 = sbr.rel target = $region54
              $region59: #{_up4_forward_impl.1} parent=51 // loop_exit
                _
            $region52: #{_up4_forward_impl.1} parent=43 // pred_fallthru
              _
          $region44: #{_up4_forward_impl.1} parent=39 // pred_fallthru
            _
          %457 = vnop
        $region40: #{_up4_forward_impl.1} parent=35 // pred_fallthru
          _
      $region36: #{_up4_forward_impl.1} parent=5 // pred_fallthru
        _
      %p458 = scmp.le.s32.totalorder 2, %s10
      // Predicated region
      $region75: #{_up4_forward_impl.1} parent=5 // pred_check
        %p459 = pneg %p458
      $region76: #{_up4_forward_impl.1} parent=5 // pred_check_branch
        %461 = sbr.rel (%p459) target = $region78
      $region77: #{_up4_forward_impl.1} parent=5 // pred_region
        %s462 = ssub.s32 %s10, 2
        // Predicated region
        $region79: #{_up4_forward_impl.1} parent=77 // pred_check
          %p463 = pneg %p135
        $region80: #{_up4_forward_impl.1} parent=77 // pred_check_branch
          %465 = sbr.rel (%p463) target = $region82
        $region81: #{_up4_forward_impl.1} parent=77 // pred_region
          %s466 = sand.u32 %s120, 1
          %s467 = sand.u32 %s120, 1
          %s468 = smul.addr %s467, 32
          %s469 = scalar_lea.vmem [#allocation2], %s468
        $region82: #{_up4_forward_impl.1} parent=77 // pred_fallthru
          _
      $region78: #{_up4_forward_impl.1} parent=5 // pred_fallthru
        _
    $region6: #{_up4_forward_impl.1} parent=1 // loop_footer
      %s14 = sadd.s32 1, %s10
    $region7: #{_up4_forward_impl.1} parent=1 // loop_footer_branch
      %9 = sbr.rel target = $region3
    $region8: #{_up4_forward_impl.1} parent=1 // loop_exit
      _

</llo_original>
